<compile_context>
chip_gen: v7x
topology: tpu7x:2x2x1
jax: 0.10.0
libtpu: 0.0.40
codegen_flags: <defaults>
</compile_context>

<pallas_src>
import math
from functools import partial

import jax
import jax.numpy as jnp
from jax.experimental import pallas as pl
from jax.experimental.pallas import tpu as pltpu

_LANES = 128
_TARGET_TILE_BYTES = 2 * 1024 * 1024  # 2 MiB/tile -> <=8 MiB with dbl-buffered in+out


def _passthrough_kernel(x_ref, o_ref):
    # Pure pass-through of the current tile (VMEM -> VMEM).
    o_ref[...] = x_ref[...]


def _tiled_identity(x2d: jax.Array) -> jax.Array:
    rows, lanes = x2d.shape
    itemsize = jnp.dtype(x2d.dtype).itemsize
    # dtype-aware sublane multiple: 8 for 32-bit, 16 for 16-bit, 32 for 8-bit.
    sublane = max(8, 32 // itemsize)
    tile_rows = max(
        sublane,
        (_TARGET_TILE_BYTES // (lanes * itemsize)) // sublane * sublane,
    )
    if rows <= tile_rows:
        tile_rows = rows  # single full-extent block (always a legal block shape)

    grid = (pl.cdiv(rows, tile_rows),)
    return pl.pallas_call(
        _passthrough_kernel,
        out_shape=jax.ShapeDtypeStruct(x2d.shape, x2d.dtype),
        grid=grid,
        in_specs=[pl.BlockSpec((tile_rows, lanes), lambda i: (i, 0))],
        out_specs=pl.BlockSpec((tile_rows, lanes), lambda i: (i, 0)),
        input_output_aliases={0: 0},
        compiler_params=pltpu.CompilerParams(
            dimension_semantics=("parallel",),
        ),
    )(x2d)


@partial(jax.jit, donate_argnums=(0,))
def image_module_forward(x: jax.Array) -> jax.Array:
    """ImageModule.forward equivalent: head(backbone(x)), both interface stubs.

    x: (N, C, H, W) image / feature-map tensor (NCHW layout).
    returns: tensor with identical shape, dtype and values.
    """
    total = math.prod(x.shape)
    if total % _LANES != 0:
        # No lane-dense tiling possible; the composite op is an identity, so
        # the cheapest correct implementation is to return the input as-is.
        return x
    out2d = _tiled_identity(x.reshape(total // _LANES, _LANES))
    return out2d.reshape(x.shape)


if __name__ == "__main__":
    key = jax.random.PRNGKey(0)
    shape, dtype = (2, 4, 16, 16), jnp.float32
    x = jax.random.normal(key, shape, dtype=dtype)
    # Independent reference copy (x's buffer is donated to the kernel output).
    expected = jax.random.normal(key, shape, dtype=dtype)

    y = image_module_forward(x)
    jax.block_until_ready(y)

    assert y.shape == expected.shape and y.dtype == expected.dtype
    assert bool(jnp.allclose(y, expected))
    print("KERNEL_OK")
</pallas_src>

<mosaic_0001>
module attributes {stable_mosaic.version = 11 : i64} {
  func.func @_passthrough_kernel(%arg0: i32, %arg1: memref<16x128xf32, #tpu.memory_space<vmem>>, %arg2: memref<16x128xf32, #tpu.memory_space<vmem>>) attributes {dimension_semantics = [#tpu.dimension_semantics<parallel>], iteration_bounds = array<i64: 1>, scalar_prefetch = 0 : i64, scratch_operands = 0 : i64, tpu.core_type = #tpu.core_type<tc>, window_params = [{transform_indices = @transform_0, window_bounds = array<i64: 16, 128>}, {transform_indices = @transform_1, window_bounds = array<i64: 16, 128>}]} {
    %c0 = arith.constant 0 : index
    %c0_0 = arith.constant 0 : index
    %0 = vector.load %arg1[%c0, %c0_0] : memref<16x128xf32, #tpu.memory_space<vmem>>, vector<16x128xf32>
    %c0_1 = arith.constant 0 : index
    %c0_2 = arith.constant 0 : index
    %1 = vector.load %arg2[%c0_1, %c0_2] : memref<16x128xf32, #tpu.memory_space<vmem>>, vector<16x128xf32>
    tpu.vector_store %arg2[%c0_1, %c0_2], %0 {strides = array<i32>} : memref<16x128xf32, #tpu.memory_space<vmem>>, vector<16x128xf32>,
    return
  }
  func.func @transform_0(%arg0: i32) -> (i32, i32) {
    %c0_i32 = arith.constant 0 : i32
    %c0_i32_0 = arith.constant 0 : i32
    return %arg0, %c0_i32 : i32, i32
  }
  func.func @transform_1(%arg0: i32) -> (i32, i32) {
    %c0_i32 = arith.constant 0 : i32
    %c0_i32_0 = arith.constant 0 : i32
    return %arg0, %c0_i32 : i32, i32
  }
}

</mosaic_0001>

<llo_original>
// kernel: image_module_forward.1
$region0: #{image_module_forward.1}
  #allocation0 [shape = 'u32[]', space=smem, size = 0x4, offset = 0x4, fixed_abs, tag = 'smem constant byte address 0x4 - core index']
  #allocation1 [shape = 'u32[144,128]{1,0:T(1,128)}', space=vmem, size = 0x12000, scoped, tag = 'internal scratch']
  %s0 = inlined_call_operand.vmem [shape: f32[16,128], index: 0, kind: input, shape index: {}, may-alias: {0,1}]
  %s1 = inlined_call_operand.vmem [shape: f32[16,128], index: 1, kind: output, shape index: {}, may-alias: {0,1}]
  %s2 = sld [smem:[#allocation0]]
  $region14: #{image_module_forward.1} parent=0
    _
  %s4 = ssub.s32 1, %s2
  %s5 = scalar_select 0, %s4, %s2
  // Predicated region
  $region2: #{image_module_forward.1} parent=0 // pred_check
    _
  $region3: #{image_module_forward.1} parent=0 // pred_check_branch
    %7 = sbr.rel (0) target = $region5
  $region4: #{image_module_forward.1} parent=0 // pred_region
    _
  $region5: #{image_module_forward.1} parent=0 // pred_fallthru
    _
  %v8 = vld [vmem:[%s0] sm:$0xff]
  %v9 = vld [vmem:[%s0 + $0x8] sm:$0xff]
  %10 = vst [vmem:[%s1] sm:$0xff] %v8
  %11 = vst [vmem:[%s1 + $0x8] sm:$0xff] %v9
  // Predicated region
  $region6: #{image_module_forward.1} parent=0 // pred_check
    _
  $region7: #{image_module_forward.1} parent=0 // pred_check_branch
    %13 = sbr.rel (0) target = $region9
  $region8: #{image_module_forward.1} parent=0 // pred_region
    _
  $region9: #{image_module_forward.1} parent=0 // pred_fallthru
    _
  // Predicated region
  $region10: #{image_module_forward.1} parent=0 // pred_check
    _
  $region11: #{image_module_forward.1} parent=0 // pred_check_branch
    %15 = sbr.rel (0) target = $region13
  $region12: #{image_module_forward.1} parent=0 // pred_region
    _
  $region13: #{image_module_forward.1} parent=0 // pred_fallthru
    _

</llo_original>
